<compile_context>
chip_gen: v6e
topology: v6e:2x2x1
jax: 0.10.0
libtpu: 0.0.40
codegen_flags: <defaults>
</compile_context>

<pallas_src>
import functools

import jax
import jax.numpy as jnp
from jax import lax
from jax.experimental import pallas as pl
from jax.experimental.pallas import tpu as pltpu


def _round_up(x, m):
    return ((x + m - 1) // m) * m


def _supcon_kernel(alab_ref, clab_ref, anchor_ref, contrast_ref, out_ref,
                   m_sc, s_sc, p_sc, c_sc, *, inv_temp, n_valid):
    """One (anchor-tile, contrast-tile) step of the online masked LSE.

    alab_ref:     [TA, 1] int32  anchor-row labels (padding rows: sentinel)
    clab_ref:     [1, TN] int32  contrast-col labels (padding cols: sentinel)
    anchor_ref:   [TA, D] features
    contrast_ref: [TN, D] features
    out_ref:      [TA, 1] f32    mean_log_prob_pos per anchor row
    scratch:      running max / exp-sum / masked-logit-sum / positive-count
    """
    ni = pl.program_id(1)

    @pl.when(ni == 0)
    def _():
        m_sc[...] = jnp.full_like(m_sc, -jnp.inf)
        s_sc[...] = jnp.zeros_like(s_sc)
        p_sc[...] = jnp.zeros_like(p_sc)
        c_sc[...] = jnp.zeros_like(c_sc)

    a = anchor_ref[...]
    c = contrast_ref[...]
    # MXU matmul contracting last dims of both operands (no RHS transpose).
    logits = lax.dot_general(
        a, c, dimension_numbers=(((1,), (1,)), ((), ())),
        preferred_element_type=jnp.float32) * jnp.float32(inv_temp)   # [TA, TN]

    ta, tn = logits.shape
    row_g = pl.program_id(0) * ta + lax.broadcasted_iota(jnp.int32, (ta, tn), 0)
    col_g = ni * tn + lax.broadcasted_iota(jnp.int32, (ta, tn), 1)

    valid_col = col_g < n_valid                              # drop N padding
    # logits_mask: remove self-contrast column j == anchor row index i
    lm = jnp.logical_and(col_g != row_g, valid_col)
    # positive mask: same label, not self, not padding
    pos = jnp.logical_and(alab_ref[...] == clab_ref[...], lm)

    # Online log-sum-exp over contrast tiles.  Max is taken over ALL real
    # columns (incl. the self column) to match the PyTorch stabilizer.
    m_prev = m_sc[...]
    tile_max = jnp.max(jnp.where(valid_col, logits, -jnp.inf),
                       axis=1, keepdims=True)
    m_new = jnp.maximum(m_prev, tile_max)
    alpha = jnp.exp(m_prev - m_new)
    e = jnp.where(lm, jnp.exp(logits - m_new), 0.0)
    s_sc[...] = alpha * s_sc[...] + jnp.sum(e, axis=1, keepdims=True)
    p_sc[...] = p_sc[...] + jnp.sum(jnp.where(pos, logits, 0.0),
                                    axis=1, keepdims=True)
    c_sc[...] = c_sc[...] + jnp.sum(pos.astype(jnp.float32),
                                    axis=1, keepdims=True)
    m_sc[...] = m_new

    @pl.when(ni == pl.num_programs(1) - 1)
    def _():
        # mean_log_prob_pos_i = sum(mask*logits)/cnt - logsumexp_masked
        lse = m_sc[...] + jnp.log(s_sc[...])
        out_ref[...] = p_sc[...] / c_sc[...] - lse


def supcon_loss(features, labels=None, mask=None, *, temperature=0.2,
                contrast_mode='one'):
    """Pallas implementation of SupConLoss.forward (returns scalar f32)."""
    if features.ndim < 3:
        raise ValueError('`features` needs to be [bsz, n_views, ...], '
                         'at least 3 dimensions are required')
    if labels is not None and mask is not None:
        raise ValueError('Cannot define both `labels` and `mask`')
    if mask is not None:
        # TODO(synk): explicit (possibly asymmetric) `mask` argument is not
        # supported by the fused kernel; only the labels / eye-mask paths are.
        raise NotImplementedError('explicit `mask` not supported by kernel')

    B, V = features.shape[0], features.shape[1]
    feats = features.reshape(B, V, -1)          # keep native dtype (no f32 upcast)
    D = feats.shape[-1]

    if labels is None:
        # SimCLR / eye-mask case == each sample is its own class.
        samp_labels = jnp.arange(B, dtype=jnp.int32)
    else:
        samp_labels = jnp.asarray(labels, dtype=jnp.int32).reshape(-1)
        if samp_labels.shape[0] != B:
            raise ValueError('Num of labels does not match num of features')

    # contrast_feature = torch.cat(torch.unbind(features, dim=1)) -> view-major
    contrast = jnp.transpose(feats, (1, 0, 2)).reshape(V * B, D)
    contrast_labels = jnp.tile(samp_labels, V)
    if contrast_mode == 'one':
        anchor = feats[:, 0]
        anchor_labels = samp_labels
    elif contrast_mode == 'all':
        anchor = contrast
        anchor_labels = contrast_labels
    else:
        raise ValueError('Unknown mode: {}'.format(contrast_mode))

    A, N = anchor.shape[0], contrast.shape[0]

    # ---- tiling / padding (lane-aligned, VMEM-budget aware) ----------------
    d_pad = _round_up(D, 128)
    ta = min(128, _round_up(A, 8))
    a_pad = _round_up(A, ta)
    if d_pad <= 2048:
        tn_cap = 512
    elif d_pad <= 4096:
        tn_cap = 256
    else:
        tn_cap = 128
    tn = min(tn_cap, _round_up(N, 128))
    n_pad = _round_up(N, tn)

    anchor_p = jnp.zeros((a_pad, d_pad), anchor.dtype).at[:A, :D].set(anchor)
    contrast_p = jnp.zeros((n_pad, d_pad), contrast.dtype).at[:N, :D].set(contrast)
    alab_p = jnp.full((a_pad, 1), -1, jnp.int32).at[:A, 0].set(anchor_labels)
    clab_p = jnp.full((1, n_pad), -1, jnp.int32).at[0, :N].set(contrast_labels)

    grid = (a_pad // ta, n_pad // tn)
    kernel = functools.partial(_supcon_kernel,
                               inv_temp=float(1.0 / temperature),
                               n_valid=N)

    mlpp = pl.pallas_call(
        kernel,
        out_shape=jax.ShapeDtypeStruct((a_pad, 1), jnp.float32),
        grid_spec=pltpu.PrefetchScalarGridSpec(
            num_scalar_prefetch=0,
            grid=grid,
            in_specs=[
                pl.BlockSpec((ta, 1), lambda i, n: (i, 0)),       # anchor labels
                pl.BlockSpec((1, tn), lambda i, n: (0, n)),       # contrast labels
                pl.BlockSpec((ta, d_pad), lambda i, n: (i, 0)),   # anchor tile
                pl.BlockSpec((tn, d_pad), lambda i, n: (n, 0)),   # contrast tile
            ],
            out_specs=pl.BlockSpec((ta, 1), lambda i, n: (i, 0)),
            scratch_shapes=[pltpu.VMEM((ta, 1), jnp.float32)] * 4,
        ),
        compiler_params=pltpu.CompilerParams(
            dimension_semantics=("parallel", "arbitrary"),
            vmem_limit_bytes=48 * 1024 * 1024),
    )(alab_p, clab_p, anchor_p, contrast_p)

    # loss = (-T * mean_log_prob_pos).view(anchor_count, bsz).mean()
    return -float(temperature) * jnp.mean(mlpp[:A, 0])


def _supcon_ref(features, labels=None, temperature=0.2, contrast_mode='one'):
    """Pure-JAX reference mirroring the PyTorch forward."""
    B, V = features.shape[0], features.shape[1]
    feats = features.reshape(B, V, -1).astype(jnp.float32)
    if labels is None:
        mask = jnp.eye(B, dtype=jnp.float32)
    else:
        lab = jnp.asarray(labels).reshape(-1, 1)
        mask = (lab == lab.T).astype(jnp.float32)
    contrast = jnp.transpose(feats, (1, 0, 2)).reshape(V * B, -1)
    if contrast_mode == 'one':
        anchor = feats[:, 0]; ac = 1
    else:
        anchor = contrast; ac = V
    A, N = ac * B, V * B
    logits = (anchor @ contrast.T) / temperature
    logits = logits - jnp.max(logits, axis=1, keepdims=True)
    mask_rep = jnp.tile(mask, (ac, V))
    lm = jnp.ones((A, N), jnp.float32).at[jnp.arange(A), jnp.arange(A)].set(0.0)
    mask_rep = mask_rep * lm
    exp_logits = jnp.exp(logits) * lm
    log_prob = logits - jnp.log(exp_logits.sum(1, keepdims=True))
    mlpp = (mask_rep * log_prob).sum(1) / mask_rep.sum(1)
    return (-temperature * mlpp).mean()


if __name__ == "__main__":
    key = jax.random.PRNGKey(0)
    B, V, C, S = 8, 2, 4, 8
    raw = jax.random.normal(key, (B, V, C, S), dtype=jnp.float32)
    # SupCon consumes L2-normalized embeddings; un-normalized random features
    # at T=0.2 drive the masked softmax denominator to exact f32 zero (-inf
    # loss) in the PyTorch original too, so normalize the demo inputs.
    flat = raw.reshape(B, V, -1)
    flat = flat / jnp.linalg.norm(flat, axis=-1, keepdims=True)
    features = flat.reshape(B, V, C, S)

    # 1) SimCLR / eye-mask path, contrast_mode='one' (module defaults)
    loss = jax.block_until_ready(supcon_loss(features, temperature=0.2))
    ref = jax.block_until_ready(_supcon_ref(features, temperature=0.2))
    assert jnp.isfinite(loss), ("non-finite loss", loss)
    assert jnp.allclose(loss, ref, rtol=1e-4, atol=1e-5), (loss, ref)

    # 2) Supervised (labels) path
    labels = jnp.array([0, 1, 0, 1, 2, 2, 3, 3], dtype=jnp.int32)
    loss_l = jax.block_until_ready(
        supcon_loss(features, labels=labels, temperature=0.2))
    ref_l = jax.block_until_ready(
        _supcon_ref(features, labels=labels, temperature=0.2))
    assert jnp.isfinite(loss_l), ("non-finite loss (labels)", loss_l)
    assert jnp.allclose(loss_l, ref_l, rtol=1e-4, atol=1e-5), (loss_l, ref_l)

    # 3) contrast_mode='all'
    loss_a = jax.block_until_ready(
        supcon_loss(features, labels=labels, temperature=0.2,
                    contrast_mode='all'))
    ref_a = jax.block_until_ready(
        _supcon_ref(features, labels=labels, temperature=0.2,
                    contrast_mode='all'))
    assert jnp.isfinite(loss_a), ("non-finite loss (all)", loss_a)
    assert jnp.allclose(loss_a, ref_a, rtol=1e-4, atol=1e-5), (loss_a, ref_a)

    print("KERNEL_OK")
</pallas_src>

<mosaic_0001>
module attributes {stable_mosaic.version = 11 : i64} {
  func.func @_supcon_kernel(%arg0: i32, %arg1: i32, %arg2: memref<8x1xi32, #tpu.memory_space<vmem>>, %arg3: memref<1x128xi32, #tpu.memory_space<vmem>>, %arg4: memref<8x128xf32, #tpu.memory_space<vmem>>, %arg5: memref<128x128xf32, #tpu.memory_space<vmem>>, %arg6: memref<8x1xf32, #tpu.memory_space<vmem>>, %arg7: memref<8x1xf32, #tpu.memory_space<vmem>>, %arg8: memref<8x1xf32, #tpu.memory_space<vmem>>, %arg9: memref<8x1xf32, #tpu.memory_space<vmem>>, %arg10: memref<8x1xf32, #tpu.memory_space<vmem>>) attributes {dimension_semantics = [#tpu.dimension_semantics<parallel>, #tpu.dimension_semantics<arbitrary>], iteration_bounds = array<i64: 1, 1>, scalar_prefetch = 0 : i64, scratch_operands = 4 : i64, tpu.core_type = #tpu.core_type<tc>, window_params = [{transform_indices = @transform_0, window_bounds = array<i64: 8, 1>}, {transform_indices = @transform_1, window_bounds = array<i64: 1, 128>}, {transform_indices = @transform_2, window_bounds = array<i64: 8, 128>}, {transform_indices = @transform_3, window_bounds = array<i64: 128, 128>}, {transform_indices = @transform_4, window_bounds = array<i64: 8, 1>}]} {
    %c0_i32 = arith.constant 0 : i32
    %0 = arith.cmpi eq, %arg1, %c0_i32 : i32
    %1 = arith.extui %0 : i1 to i32
    %c0_i32_0 = arith.constant 0 : i32
    %2 = arith.cmpi ne, %1, %c0_i32_0 : i32
    scf.if %2 {
      %cst_34 = arith.constant 0xFF800000 : f32
      %63 = vector.broadcast %cst_34 : f32 to vector<8x1xf32>
      %c0_35 = arith.constant 0 : index
      %c0_36 = arith.constant 0 : index
      %64 = vector.load %arg7[%c0_35, %c0_36] : memref<8x1xf32, #tpu.memory_space<vmem>>, vector<8x1xf32>
      tpu.vector_store %arg7[%c0_35, %c0_36], %63 {strides = array<i32>} : memref<8x1xf32, #tpu.memory_space<vmem>>, vector<8x1xf32>,
      %cst_37 = arith.constant 0.000000e+00 : f32
      %65 = vector.broadcast %cst_37 : f32 to vector<8x1xf32>
      %c0_38 = arith.constant 0 : index
      %c0_39 = arith.constant 0 : index
      %66 = vector.load %arg8[%c0_38, %c0_39] : memref<8x1xf32, #tpu.memory_space<vmem>>, vector<8x1xf32>
      tpu.vector_store %arg8[%c0_38, %c0_39], %65 {strides = array<i32>} : memref<8x1xf32, #tpu.memory_space<vmem>>, vector<8x1xf32>,
      %cst_40 = arith.constant 0.000000e+00 : f32
      %67 = vector.broadcast %cst_40 : f32 to vector<8x1xf32>
      %c0_41 = arith.constant 0 : index
      %c0_42 = arith.constant 0 : index
      %68 = vector.load %arg9[%c0_41, %c0_42] : memref<8x1xf32, #tpu.memory_space<vmem>>, vector<8x1xf32>
      tpu.vector_store %arg9[%c0_41, %c0_42], %67 {strides = array<i32>} : memref<8x1xf32, #tpu.memory_space<vmem>>, vector<8x1xf32>,
      %cst_43 = arith.constant 0.000000e+00 : f32
      %69 = vector.broadcast %cst_43 : f32 to vector<8x1xf32>
      %c0_44 = arith.constant 0 : index
      %c0_45 = arith.constant 0 : index
      %70 = vector.load %arg10[%c0_44, %c0_45] : memref<8x1xf32, #tpu.memory_space<vmem>>, vector<8x1xf32>
      tpu.vector_store %arg10[%c0_44, %c0_45], %69 {strides = array<i32>} : memref<8x1xf32, #tpu.memory_space<vmem>>, vector<8x1xf32>,
    } else {
    }
    %c0 = arith.constant 0 : index
    %c0_1 = arith.constant 0 : index
    %3 = vector.load %arg4[%c0, %c0_1] : memref<8x128xf32, #tpu.memory_space<vmem>>, vector<8x128xf32>
    %c0_2 = arith.constant 0 : index
    %c0_3 = arith.constant 0 : index
    %4 = vector.load %arg5[%c0_2, %c0_3] : memref<128x128xf32, #tpu.memory_space<vmem>>, vector<128x128xf32>
    %cst = arith.constant dense<0.000000e+00> : vector<8x128xf32>
    %5 = tpu.matmul %3, %4, %cst {dimension_numbers = #tpu.dot_dimension_numbers<[1], [1], [0], [0], [0, 0, 1, 0], [], []>} : vector<8x128xf32>, vector<128x128xf32>, vector<8x128xf32> -> vector<8x128xf32>
    %cst_4 = arith.constant 5.000000e+00 : f32
    %6 = vector.broadcast %cst_4 : f32 to vector<8x128xf32>
    %7 = arith.mulf %5, %6 : vector<8x128xf32>
    %c8_i32 = arith.constant 8 : i32
    %8 = arith.muli %arg0, %c8_i32 : i32
    %9 = tpu.iota {dimensions = array<i32: 0>} : vector<8x128xi32>
    %10 = vector.broadcast %8 : i32 to vector<8x128xi32>
    %11 = arith.addi %10, %9 : vector<8x128xi32>
    %c128_i32 = arith.constant 128 : i32
    %12 = arith.muli %arg1, %c128_i32 : i32
    %13 = tpu.iota {dimensions = array<i32: 1>} : vector<8x128xi32>
    %14 = vector.broadcast %12 : i32 to vector<8x128xi32>
    %15 = arith.addi %14, %13 : vector<8x128xi32>
    %c16_i32 = arith.constant 16 : i32
    %16 = vector.broadcast %c16_i32 : i32 to vector<8x128xi32>
    %17 = arith.cmpi slt, %15, %16 : vector<8x128xi32>
    %18 = arith.cmpi ne, %15, %11 : vector<8x128xi32>
    %19 = arith.andi %18, %17 : vector<8x128xi1>
    %c0_5 = arith.constant 0 : index
    %c0_6 = arith.constant 0 : index
    %20 = vector.load %arg2[%c0_5, %c0_6] : memref<8x1xi32, #tpu.memory_space<vmem>>, vector<8x1xi32>
    %c0_7 = arith.constant 0 : index
    %c0_8 = arith.constant 0 : index
    %21 = vector.load %arg3[%c0_7, %c0_8] : memref<1x128xi32, #tpu.memory_space<vmem>>, vector<1x128xi32>
    %22 = vector.broadcast %20 : vector<8x1xi32> to vector<8x128xi32>
    %23 = vector.broadcast %21 : vector<1x128xi32> to vector<8x128xi32>
    %24 = arith.cmpi eq, %22, %23 : vector<8x128xi32>
    %25 = arith.andi %24, %19 : vector<8x128xi1>
    %c0_9 = arith.constant 0 : index
    %c0_10 = arith.constant 0 : index
    %26 = vector.load %arg7[%c0_9, %c0_10] : memref<8x1xf32, #tpu.memory_space<vmem>>, vector<8x1xf32>
    %cst_11 = arith.constant 0xFF800000 : f32
    %27 = vector.broadcast %cst_11 : f32 to vector<8x128xf32>
    %28 = arith.select %17, %7, %27 : vector<8x128xi1>, vector<8x128xf32>
    %cst_12 = arith.constant dense<0xFF800000> : vector<8xf32>
    %29 = vector.multi_reduction <maximumf>, %28, %cst_12 [1] : vector<8x128xf32> to vector<8xf32>
    %30 = vector.shape_cast %29 : vector<8xf32> to vector<8x1xf32>
    %31 = arith.maximumf %26, %30 : vector<8x1xf32>
    %32 = arith.subf %26, %31 : vector<8x1xf32>
    %33 = math.exp %32 : vector<8x1xf32>
    %34 = vector.broadcast %31 : vector<8x1xf32> to vector<8x128xf32>
    %35 = arith.subf %7, %34 : vector<8x128xf32>
    %36 = math.exp %35 : vector<8x128xf32>
    %cst_13 = arith.constant 0.000000e+00 : f32
    %37 = vector.broadcast %cst_13 : f32 to vector<8x128xf32>
    %38 = arith.select %19, %36, %37 : vector<8x128xi1>, vector<8x128xf32>
    %c0_14 = arith.constant 0 : index
    %c0_15 = arith.constant 0 : index
    %39 = vector.load %arg8[%c0_14, %c0_15] : memref<8x1xf32, #tpu.memory_space<vmem>>, vector<8x1xf32>
    %40 = arith.mulf %33, %39 : vector<8x1xf32>
    %cst_16 = arith.constant dense<0.000000e+00> : vector<8xf32>
    %41 = vector.multi_reduction <add>, %38, %cst_16 [1] : vector<8x128xf32> to vector<8xf32>
    %42 = vector.shape_cast %41 : vector<8xf32> to vector<8x1xf32>
    %43 = arith.addf %40, %42 : vector<8x1xf32>
    %c0_17 = arith.constant 0 : index
    %c0_18 = arith.constant 0 : index
    %44 = vector.load %arg8[%c0_17, %c0_18] : memref<8x1xf32, #tpu.memory_space<vmem>>, vector<8x1xf32>
    tpu.vector_store %arg8[%c0_17, %c0_18], %43 {strides = array<i32>} : memref<8x1xf32, #tpu.memory_space<vmem>>, vector<8x1xf32>,
    %c0_19 = arith.constant 0 : index
    %c0_20 = arith.constant 0 : index
    %45 = vector.load %arg9[%c0_19, %c0_20] : memref<8x1xf32, #tpu.memory_space<vmem>>, vector<8x1xf32>
    %cst_21 = arith.constant 0.000000e+00 : f32
    %46 = vector.broadcast %cst_21 : f32 to vector<8x128xf32>
    %47 = arith.select %25, %7, %46 : vector<8x128xi1>, vector<8x128xf32>
    %cst_22 = arith.constant dense<0.000000e+00> : vector<8xf32>
    %48 = vector.multi_reduction <add>, %47, %cst_22 [1] : vector<8x128xf32> to vector<8xf32>
    %49 = vector.shape_cast %48 : vector<8xf32> to vector<8x1xf32>
    %50 = arith.addf %45, %49 : vector<8x1xf32>
    %c0_23 = arith.constant 0 : index
    %c0_24 = arith.constant 0 : index
    %51 = vector.load %arg9[%c0_23, %c0_24] : memref<8x1xf32, #tpu.memory_space<vmem>>, vector<8x1xf32>
    tpu.vector_store %arg9[%c0_23, %c0_24], %50 {strides = array<i32>} : memref<8x1xf32, #tpu.memory_space<vmem>>, vector<8x1xf32>,
    %c0_25 = arith.constant 0 : index
    %c0_26 = arith.constant 0 : index
    %52 = vector.load %arg10[%c0_25, %c0_26] : memref<8x1xf32, #tpu.memory_space<vmem>>, vector<8x1xf32>
    %53 = arith.extui %25 : vector<8x128xi1> to vector<8x128xi32>
    %54 = arith.sitofp %53 : vector<8x128xi32> to vector<8x128xf32>
    %cst_27 = arith.constant dense<0.000000e+00> : vector<8xf32>
    %55 = vector.multi_reduction <add>, %54, %cst_27 [1] : vector<8x128xf32> to vector<8xf32>
    %56 = vector.shape_cast %55 : vector<8xf32> to vector<8x1xf32>
    %57 = arith.addf %52, %56 : vector<8x1xf32>
    %c0_28 = arith.constant 0 : index
    %c0_29 = arith.constant 0 : index
    %58 = vector.load %arg10[%c0_28, %c0_29] : memref<8x1xf32, #tpu.memory_space<vmem>>, vector<8x1xf32>
    tpu.vector_store %arg10[%c0_28, %c0_29], %57 {strides = array<i32>} : memref<8x1xf32, #tpu.memory_space<vmem>>, vector<8x1xf32>,
    %c0_30 = arith.constant 0 : index
    %c0_31 = arith.constant 0 : index
    %59 = vector.load %arg7[%c0_30, %c0_31] : memref<8x1xf32, #tpu.memory_space<vmem>>, vector<8x1xf32>
    tpu.vector_store %arg7[%c0_30, %c0_31], %31 {strides = array<i32>} : memref<8x1xf32, #tpu.memory_space<vmem>>, vector<8x1xf32>,
    %c0_i32_32 = arith.constant 0 : i32
    %60 = arith.cmpi eq, %arg1, %c0_i32_32 : i32
    %61 = arith.extui %60 : i1 to i32
    %c0_i32_33 = arith.constant 0 : i32
    %62 = arith.cmpi ne, %61, %c0_i32_33 : i32
    scf.if %62 {
      %c0_34 = arith.constant 0 : index
      %c0_35 = arith.constant 0 : index
      %63 = vector.load %arg7[%c0_34, %c0_35] : memref<8x1xf32, #tpu.memory_space<vmem>>, vector<8x1xf32>
      %c0_36 = arith.constant 0 : index
      %c0_37 = arith.constant 0 : index
      %64 = vector.load %arg8[%c0_36, %c0_37] : memref<8x1xf32, #tpu.memory_space<vmem>>, vector<8x1xf32>
      %65 = math.log %64 : vector<8x1xf32>
      %66 = arith.addf %63, %65 : vector<8x1xf32>
      %c0_38 = arith.constant 0 : index
      %c0_39 = arith.constant 0 : index
      %67 = vector.load %arg9[%c0_38, %c0_39] : memref<8x1xf32, #tpu.memory_space<vmem>>, vector<8x1xf32>
      %c0_40 = arith.constant 0 : index
      %c0_41 = arith.constant 0 : index
      %68 = vector.load %arg10[%c0_40, %c0_41] : memref<8x1xf32, #tpu.memory_space<vmem>>, vector<8x1xf32>
      %69 = arith.divf %67, %68 : vector<8x1xf32>
      %70 = arith.subf %69, %66 : vector<8x1xf32>
      %c0_42 = arith.constant 0 : index
      %c0_43 = arith.constant 0 : index
      %71 = vector.load %arg6[%c0_42, %c0_43] : memref<8x1xf32, #tpu.memory_space<vmem>>, vector<8x1xf32>
      tpu.vector_store %arg6[%c0_42, %c0_43], %70 {strides = array<i32>} : memref<8x1xf32, #tpu.memory_space<vmem>>, vector<8x1xf32>,
    } else {
    }
    return
  }
  func.func @transform_0(%arg0: i32, %arg1: i32) -> (i32, i32) {
    %c0_i32 = arith.constant 0 : i32
    %c0_i32_0 = arith.constant 0 : i32
    return %arg0, %c0_i32 : i32, i32
  }
  func.func @transform_1(%arg0: i32, %arg1: i32) -> (i32, i32) {
    %c0_i32 = arith.constant 0 : i32
    %c0_i32_0 = arith.constant 0 : i32
    return %c0_i32, %arg1 : i32, i32
  }
  func.func @transform_2(%arg0: i32, %arg1: i32) -> (i32, i32) {
    %c0_i32 = arith.constant 0 : i32
    %c0_i32_0 = arith.constant 0 : i32
    return %arg0, %c0_i32 : i32, i32
  }
  func.func @transform_3(%arg0: i32, %arg1: i32) -> (i32, i32) {
    %c0_i32 = arith.constant 0 : i32
    %c0_i32_0 = arith.constant 0 : i32
    return %arg1, %c0_i32 : i32, i32
  }
  func.func @transform_4(%arg0: i32, %arg1: i32) -> (i32, i32) {
    %c0_i32 = arith.constant 0 : i32
    %c0_i32_0 = arith.constant 0 : i32
    return %arg0, %c0_i32 : i32, i32
  }
}

</mosaic_0001>

<llo_original>
// kernel: tpu_custom_call.1
$region0: #{tpu_custom_call.1}
  #allocation0 [shape = 'u32[]', space=smem, size = 0x4, offset = 0x4, fixed_abs, tag = 'smem constant byte address 0x4 - core index']
  #allocation1 [shape = 'u32[144,128]{1,0:T(1,128)}', space=vmem, size = 0x12000, scoped, tag = 'internal scratch']
  #allocation2 [shape = 'f32[8,1]{1,0:T(8,128)}', space=vmem, size = 0x1000, scoped, tag = 'scratch operand']
  #allocation3 [shape = 'f32[8,1]{1,0:T(8,128)}', space=vmem, size = 0x1000, scoped, tag = 'scratch operand']
  #allocation4 [shape = 'f32[8,1]{1,0:T(8,128)}', space=vmem, size = 0x1000, scoped, tag = 'scratch operand']
  #allocation5 [shape = 'f32[8,1]{1,0:T(8,128)}', space=vmem, size = 0x1000, scoped, tag = 'scratch operand']
  %s0 = inlined_call_operand.vmem [shape: s32[8,1], index: 0, kind: input, shape index: {}]
  %s1 = inlined_call_operand.vmem [shape: s32[1,128], index: 1, kind: input, shape index: {}]
  %s2 = inlined_call_operand.vmem [shape: f32[8,128], index: 2, kind: input, shape index: {}]
  %s3 = inlined_call_operand.hbm [shape: f32[128,128], index: 3, kind: input, shape index: {}]
  %s4 = inlined_call_operand.vmem [shape: f32[8,1], index: 4, kind: output, shape index: {}]
  %s5 = sld [smem:[#allocation0]]
  $region38: #{tpu_custom_call.1} parent=0
    _
  %s7 = ssub.s32 1, %s5
  %s8 = scalar_select 0, %s7, %s5
  $region1: #{tpu_custom_call.1} parent=0
    #allocation6 [shape = 'u8[65536]{0}', space=vmem, size = 0x10000, scoped, tag = 'input window, operand 3, single buffered']
    #allocation7 [shape = 's32[1]{0}', space=sflag, size = 0x4, scoped, tag = 'scoped memory for tpu_custom_call.1']
    %9 = vsyncpa [#allocation7], 0
    // Predicated region
    $region2: #{tpu_custom_call.1} parent=1 // pred_check
      _
    $region3: #{tpu_custom_call.1} parent=1 // pred_check_branch
      %11 = sbr.rel (0) target = $region5
    $region4: #{tpu_custom_call.1} parent=1 // pred_region
      _
    $region5: #{tpu_custom_call.1} parent=1 // pred_fallthru
      _
    // Predicated region
    $region6: #{tpu_custom_call.1} parent=1 // pred_check
      _
    $region7: #{tpu_custom_call.1} parent=1 // pred_check_branch
      %13 = sbr.rel (0) target = $region9
    $region8: #{tpu_custom_call.1} parent=1 // pred_region
      _
    $region9: #{tpu_custom_call.1} parent=1 // pred_fallthru
      _
    // Predicated region
    $region10: #{tpu_custom_call.1} parent=1 // pred_check
      _
    $region11: #{tpu_custom_call.1} parent=1 // pred_check_branch
      %15 = sbr.rel (0) target = $region13
    $region12: #{tpu_custom_call.1} parent=1 // pred_region
      _
    $region13: #{tpu_custom_call.1} parent=1 // pred_fallthru
      _
    // Predicated region
    $region14: #{tpu_custom_call.1} parent=1 // pred_check
      _
    $region15: #{tpu_custom_call.1} parent=1 // pred_check_branch
      %17 = sbr.rel (0) target = $region17
    $region16: #{tpu_custom_call.1} parent=1 // pred_region
      %s19 = ssub.s32 2048, 2048
      %20 = vsyncadd [#allocation7], %s19
      %s21 = sshll.u32 [#allocation6], 4
      %s22 = int_to_ptr.vmem [resolvable:$true] %s21
      %27 = dma.hbm_to_vmem [thread:$0]  %s3, 2048, %s22, [#allocation7], 128, 128, 8
    $region17: #{tpu_custom_call.1} parent=1 // pred_fallthru
      _
    // Predicated region
    $region18: #{tpu_custom_call.1} parent=1 // pred_check
      _
    $region19: #{tpu_custom_call.1} parent=1 // pred_check_branch
      %29 = sbr.rel (0) target = $region21
    $region20: #{tpu_custom_call.1} parent=1 // pred_region
      %30 = dma.done [#allocation7], 2048
    $region21: #{tpu_custom_call.1} parent=1 // pred_fallthru
      _
    %p31 = scmp.eq.s32.totalorder 0, 0
    // Predicated region
    $region22: #{tpu_custom_call.1} parent=1 // pred_check
      %p32 = pneg %p31
    $region23: #{tpu_custom_call.1} parent=1 // pred_check_branch
      %34 = sbr.rel (%p32) target = $region25
    $region24: #{tpu_custom_call.1} parent=1 // pred_region
      %vm35 = vcmask 7168
      %36 = vst.msk [vmem:[#allocation2] sm:$0xff] %vm35, -inf
      %37 = vst.msk [vmem:[#allocation3] sm:$0xff] %vm35, 0.0
      %38 = vst.msk [vmem:[#allocation4] sm:$0xff] %vm35, 0.0
      %39 = vst.msk [vmem:[#allocation5] sm:$0xff] %vm35, 0.0
    $region25: #{tpu_custom_call.1} parent=1 // pred_fallthru
      _
    %v40 = vld [vmem:[%s2] sm:$0xff]
    %v41 = vld [vmem:[#allocation6] sm:$0xff]
    %v42 = vld [vmem:[#allocation6 + $0x8] sm:$0xff]
    %v43 = vld [vmem:[#allocation6 + $0x10] sm:$0xff]
    %v44 = vld [vmem:[#allocation6 + $0x18] sm:$0xff]
    %v45 = vld [vmem:[#allocation6 + $0x20] sm:$0xff]
    %v46 = vld [vmem:[#allocation6 + $0x28] sm:$0xff]
    %v47 = vld [vmem:[#allocation6 + $0x30] sm:$0xff]
    %v48 = vld [vmem:[#allocation6 + $0x38] sm:$0xff]
    %v49 = vld [vmem:[#allocation6 + $0x40] sm:$0xff]
    %v50 = vld [vmem:[#allocation6 + $0x48] sm:$0xff]
    %v51 = vld [vmem:[#allocation6 + $0x50] sm:$0xff]
    %v52 = vld [vmem:[#allocation6 + $0x58] sm:$0xff]
    %v53 = vld [vmem:[#allocation6 + $0x60] sm:$0xff]
    %v54 = vld [vmem:[#allocation6 + $0x68] sm:$0xff]
    %v55 = vld [vmem:[#allocation6 + $0x70] sm:$0xff]
    %v56 = vld [vmem:[#allocation6 + $0x78] sm:$0xff]
    %57 = vmatprep.subr.mxu0 0.0
    %58 = vmatpush1.xpose.msra.mxu0 %v56
    %59 = vmatprep.subr.mxu0 0.0
    %60 = vmatpush1.xpose.msra.mxu0 %v55
    %61 = vmatprep.subr.mxu0 0.0
    %62 = vmatpush1.xpose.msra.mxu0 %v54
    %63 = vmatprep.subr.mxu0 0.0
    %64 = vmatpush1.xpose.msra.mxu0 %v53
    %65 = vmatprep.subr.mxu0 0.0
    %66 = vmatpush1.xpose.msra.mxu0 %v52
    %67 = vmatprep.subr.mxu0 0.0
    %68 = vmatpush1.xpose.msra.mxu0 %v51
    %69 = vmatprep.subr.mxu0 0.0
    %70 = vmatpush1.xpose.msra.mxu0 %v50
    %71 = vmatprep.subr.mxu0 0.0
    %72 = vmatpush1.xpose.msra.mxu0 %v49
    %73 = vmatprep.subr.mxu0 0.0
    %74 = vmatpush1.xpose.msra.mxu0 %v48
    %75 = vmatprep.subr.mxu0 0.0
    %76 = vmatpush1.xpose.msra.mxu0 %v47
    %77 = vmatprep.subr.mxu0 0.0
    %78 = vmatpush1.xpose.msra.mxu0 %v46
    %79 = vmatprep.subr.mxu0 0.0
    %80 = vmatpush1.xpose.msra.mxu0 %v45
    %81 = vmatprep.subr.mxu0 0.0
    %82 = vmatpush1.xpose.msra.mxu0 %v44
    %83 = vmatprep.subr.mxu0 0.0
    %84 = vmatpush1.xpose.msra.mxu0 %v43
    %85 = vmatprep.subr.mxu0 0.0
    %86 = vmatpush1.xpose.msra.mxu0 %v42
    %87 = vmatprep.subr.mxu0 0.0
    %88 = vmatpush1.xpose.msra.mxu0 %v41
    %89 = vmatprep.subr.mxu0 0.0
    %90 = vmatpush2.xpose.msra.mxu0 0.0
    %91 = vmatprep.subr.mxu0 0.0
    %92 = vmatpush2.xpose.msra.mxu0 0.0
    %93 = vmatprep.subr.mxu0 0.0
    %94 = vmatpush2.xpose.msra.mxu0 0.0
    %95 = vmatprep.subr.mxu0 0.0
    %96 = vmatpush2.xpose.msra.mxu0 0.0
    %97 = vmatprep.subr.mxu0 0.0
    %98 = vmatpush2.xpose.msra.mxu0 0.0
    %99 = vmatprep.subr.mxu0 0.0
    %100 = vmatpush2.xpose.msra.mxu0 0.0
    %101 = vmatprep.subr.mxu0 0.0
    %102 = vmatpush2.xpose.msra.mxu0 0.0
    %103 = vmatprep.subr.mxu0 0.0
    %104 = vmatpush2.xpose.msra.mxu0 0.0
    %105 = vmatprep.subr.mxu0 0.0
    %106 = vmatpush2.xpose.msra.mxu0 0.0
    %107 = vmatprep.subr.mxu0 0.0
    %108 = vmatpush2.xpose.msra.mxu0 0.0
    %109 = vmatprep.subr.mxu0 0.0
    %110 = vmatpush2.xpose.msra.mxu0 0.0
    %111 = vmatprep.subr.mxu0 0.0
    %112 = vmatpush2.xpose.msra.mxu0 0.0
    %113 = vmatprep.subr.mxu0 0.0
    %114 = vmatpush2.xpose.msra.mxu0 0.0
    %115 = vmatprep.subr.mxu0 0.0
    %116 = vmatpush2.xpose.msra.mxu0 0.0
    %117 = vmatprep.subr.mxu0 0.0
    %118 = vmatpush2.xpose.msra.mxu0 0.0
    %119 = vmatprep.subr.mxu0 0.0
    %120 = vmatpush2.xpose.msra.mxu0 0.0
    %121 = vmatprep.mubr.f32.mxu0 0.0
    %122 = vmatmul.mubr.f32.gmra.mxu0 %v40
    %v123 = vpop.f32.mrf.mxu0
    %v124 = vadd.f32 0.0, %v123
    %v125 = vpop.f32.mrf.mxu0
    %126 = vdwg.mxu0
    %v127 = vmul.f32 %v124, 5.0
    %s128 = smul.u32 0, 8
    %v129 = vlaneseq
    %v130 = vshrl.u32 %v129, 7
    %v131 = vstv %s128
    %v132 = vadd.s32 %v131, %v130
    %s133 = smul.u32 0, 128
    %v134 = vlaneseq
    %v135 = vand.u32 %v134, 127
    %v136 = vstv %s133
    %v137 = vadd.s32 %v136, %v135
    %vm138 = vcmp.lt.s32.totalorder %v137, 16
    %vm139 = vcmp.ne.s32.totalorder %v137, %v132
    %vm140 = vmand %vm139, %vm138
    %v141 = vld [vmem:[%s0] sm:$0xff]
    %v142 = vld [vmem:[%s1] sm:$0x1]
    %143 = vset.pattern.permute.xlu0 0
    %144 = vperm.xlu0 %143, %v141
    %v145 = vpop.permute.xlu0 %144
    %v146 = vlaneseq
    %v147 = vshrl.u32 %v146, 7
    %v148 = vsub.s32 0, %v147
    %v149 = vrot.slane %v142, %v148
    %vm150 = vcmp.eq.s32.totalorder %v145, %v149
    %vm151 = vmand %vm150, %vm140
    %v152 = vld [vmem:[#allocation2] sm:$0xff]
    %v153 = vsel %vm138, %v127, -inf
    %154 = vmax.xlane.f32.xlu0 %v153
    %v155 = vpop.xlane.xlu0 %154
    %v156 = vmax.f32 %v152, %v155
    %v157 = vsub.f32 %v152, %v156
    %v158 = vmul.f32 %v157, 1.442695
    %v159 = vpow.pop %v158
    %161 = vset.pattern.permute.xlu0 0
    %162 = vperm.xlu0 %161, %v156
    %v163 = vpop.permute.xlu0 %162
    %v165 = vsub.f32 %v127, %v163
    %v166 = vmul.f32 %v165, 1.442695
    %v167 = vpow.pop %v166
    %v168 = vsel %vm140, %v167, 0.0
    %v169 = vld [vmem:[#allocation3] sm:$0xff]
    %v170 = vmul.f32 %v159, %v169
    %171 = vadd.xlane.f32.xlu0 %v168
    %v172 = vpop.xlane.xlu0 %171
    %v173 = vadd.f32 %v170, %v172
    %vm174 = vcmask 7168
    %175 = vst.msk [vmem:[#allocation3] sm:$0xff] %vm174, %v173
    %v176 = vld [vmem:[#allocation4] sm:$0xff]
    %v177 = vsel %vm151, %v127, 0.0
    %178 = vadd.xlane.f32.xlu0 %v177
    %v179 = vpop.xlane.xlu0 %178
    %v180 = vadd.f32 %v176, %v179
    %181 = vst.msk [vmem:[#allocation4] sm:$0xff] %vm174, %v180
    %v182 = vld [vmem:[#allocation5] sm:$0xff]
    %v183 = vsel %vm151, 1, 0
    %v184 = vcvt.s32.f32 %v183
    %185 = vadd.xlane.f32.xlu0 %v184
    %v186 = vpop.xlane.xlu0 %185
    %v187 = vadd.f32 %v182, %v186
    %188 = vst.msk [vmem:[#allocation5] sm:$0xff] %vm174, %v187
    %189 = vst.msk [vmem:[#allocation2] sm:$0xff] %vm174, %v156
    // Predicated region
    $region26: #{tpu_custom_call.1} parent=1 // pred_check
      %p190 = pneg %p31
    $region27: #{tpu_custom_call.1} parent=1 // pred_check_branch
      %192 = sbr.rel (%p190) target = $region29
    $region28: #{tpu_custom_call.1} parent=1 // pred_region
      %v193 = vld [vmem:[#allocation2] sm:$0xff]
      %v194 = vld [vmem:[#allocation3] sm:$0xff]
      %v195 = vlog2.pop %v194
      %v196 = vmul.f32 %v195, 0.6931472
      %v197 = vadd.f32 %v193, %v196
      %v198 = vld [vmem:[#allocation4] sm:$0xff]
      %v199 = vld [vmem:[#allocation5] sm:$0xff]
      %v200 = vrcp.pop %v199
      %v201 = vmul.f32 %v198, %v200
      %v202 = vsub.f32 %v201, %v197
      %203 = vst.msk [vmem:[%s4] sm:$0xff] %vm174, %v202
    $region29: #{tpu_custom_call.1} parent=1 // pred_fallthru
      _
    // Predicated region
    $region30: #{tpu_custom_call.1} parent=1 // pred_check
      _
    $region31: #{tpu_custom_call.1} parent=1 // pred_check_branch
      %205 = sbr.rel (0) target = $region33
    $region32: #{tpu_custom_call.1} parent=1 // pred_region
      _
    $region33: #{tpu_custom_call.1} parent=1 // pred_fallthru
      _
    // Predicated region
    $region34: #{tpu_custom_call.1} parent=1 // pred_check
      _
    $region35: #{tpu_custom_call.1} parent=1 // pred_check_branch
      %207 = sbr.rel (0) target = $region37
    $region36: #{tpu_custom_call.1} parent=1 // pred_region
      _
    $region37: #{tpu_custom_call.1} parent=1 // pred_fallthru
      _
    %208 = vsyncpa [#allocation7], 1

</llo_original>
